<compile_context>
chip_gen: v7x
topology: tpu7x:2x2x1
jax: 0.10.0
libtpu: 0.0.40
codegen_flags: <defaults>
</compile_context>

<pallas_src>
import jax
import jax.numpy as jnp
from jax.experimental import pallas as pl
from jax.experimental.pallas import tpu as pltpu


def _vae_kernel(x_ref, we_ref, be_ref, wd_ref, bd_ref,
                xu_ref, miu_ref, logvar_ref):
    hidden = miu_ref.shape[-1]

    # Cast x to the weight compute dtype (no-op on the default f32 path).
    x = x_ref[...].astype(we_ref.dtype)

    # Encoder: single fused matmul for both heads, f32 accumulation on the MXU.
    enc = jnp.dot(x, we_ref[...], preferred_element_type=jnp.float32) + be_ref[...]

    # Lane-aligned slices (hidden = 128 -> exact vreg lane width).
    miu = enc[:, :hidden]
    log_var = enc[:, hidden:]

    # Encoder activation = Identity, eval branch -> z_u = miu.
    # Decoder: linear back to item space, Identity activation. Decoder input is
    # cast from the f32 accumulator (not recomputed in low precision).
    x_u = jnp.dot(miu.astype(wd_ref.dtype), wd_ref[...],
                  preferred_element_type=jnp.float32) + bd_ref[...]

    miu_ref[...] = miu.astype(miu_ref.dtype)
    logvar_ref[...] = log_var.astype(logvar_ref.dtype)
    xu_ref[...] = x_u.astype(xu_ref.dtype)


def prepare_vae_params(w_miu, b_miu, w_var, b_var, w_dec, b_dec,
                       compute_dtype=jnp.float32):
    """One-time weight prep (outside the per-call hot path).

    PyTorch layout in:  w_* (out, in), b_* (out,)
    Kernel layout out:  w_enc (item_nums, 2*hidden), b_enc (1, 2*hidden),
                        w_dec (hidden, item_nums),   b_dec (1, item_nums)
    """
    w_enc = jnp.concatenate([w_miu, w_var], axis=0).T.astype(compute_dtype)
    b_enc = jnp.concatenate([b_miu, b_var]).reshape(1, -1).astype(jnp.float32)
    w_d = w_dec.T.astype(compute_dtype)
    b_d = b_dec.reshape(1, -1).astype(jnp.float32)
    return w_enc, b_enc, w_d, b_d


def vae_forward(x, params, *, block_m=256):
    """x: (B, item_nums) f32. params: output of prepare_vae_params()."""
    w_enc, b_enc, w_dec, b_dec = params
    B, item_nums = x.shape
    two_h = w_enc.shape[1]
    hidden = two_h // 2

    tm = min(block_m, B)
    grid = (pl.cdiv(B, tm),)

    out_shapes = (
        jax.ShapeDtypeStruct((B, item_nums), jnp.float32),  # x_u
        jax.ShapeDtypeStruct((B, hidden), jnp.float32),     # miu
        jax.ShapeDtypeStruct((B, hidden), jnp.float32),     # log_var
    )

    itemsize = lambda a: a.size * a.dtype.itemsize
    cost = pl.CostEstimate(
        flops=2 * B * item_nums * two_h + 2 * B * hidden * item_nums,
        transcendentals=0,
        bytes_accessed=(itemsize(x) + itemsize(w_enc) + itemsize(b_enc)
                        + itemsize(w_dec) + itemsize(b_dec)
                        + 4 * (B * item_nums + 2 * B * hidden)),
    )

    # Batch-tiled x/outputs; weights & biases are full-array blocks with a
    # constant index_map (stay resident in VMEM across batch tiles).
    full = lambda shape: pl.BlockSpec(shape, lambda i: (0,) * len(shape))

    return pl.pallas_call(
        _vae_kernel,
        out_shape=out_shapes,
        grid=grid,
        in_specs=[
            pl.BlockSpec((tm, item_nums), lambda i: (i, 0)),   # x
            full((item_nums, two_h)), full((1, two_h)),        # encoder W, b
            full((hidden, item_nums)), full((1, item_nums)),   # decoder W, b
        ],
        out_specs=[
            pl.BlockSpec((tm, item_nums), lambda i: (i, 0)),   # x_u
            pl.BlockSpec((tm, hidden), lambda i: (i, 0)),      # miu
            pl.BlockSpec((tm, hidden), lambda i: (i, 0)),      # log_var
        ],
        compiler_params=pltpu.CompilerParams(
            dimension_semantics=("parallel",)),
        cost_estimate=cost,
    )(x, w_enc, b_enc, w_dec, b_dec)


def _ref_forward(x, w_miu, b_miu, w_var, b_var, w_dec, b_dec):
    miu = x @ w_miu.T + b_miu
    log_var = x @ w_var.T + b_var
    x_u = miu @ w_dec.T + b_dec
    return x_u, miu, log_var


if __name__ == "__main__":
    # Shapes consistent with the module: item_nums=256, hidden=128.
    # batch=512 so the batch tiling (grid of 2 x 256-row blocks) is exercised.
    batch, item_nums, hidden = 512, 256, 128

    key = jax.random.PRNGKey(0)
    kx, k1, k2, k3, k4, k5, k6 = jax.random.split(key, 7)

    x = jax.random.normal(kx, (batch, item_nums), dtype=jnp.float32)

    # Deterministic parameter init (uniform, torch.nn.Linear-like fan-in scale).
    def init_linear(kw, kb, out_f, in_f):
        bound = 1.0 / (in_f ** 0.5)
        w = jax.random.uniform(kw, (out_f, in_f), jnp.float32, -bound, bound)
        b = jax.random.uniform(kb, (out_f,), jnp.float32, -bound, bound)
        return w, b

    w_miu, b_miu = init_linear(k1, k2, hidden, item_nums)
    w_var, b_var = init_linear(k3, k4, hidden, item_nums)
    w_dec, b_dec = init_linear(k5, k6, item_nums, hidden)

    # One-time layout prep (out of the hot path). Default f32 compute keeps
    # exact parity with the PyTorch module; pass compute_dtype=jnp.bfloat16 on
    # v6e/v7x if ~1e-2 relative tolerance is acceptable.
    params = prepare_vae_params(w_miu, b_miu, w_var, b_var, w_dec, b_dec)

    x_u, miu, log_var = jax.block_until_ready(vae_forward(x, params))

    # Correctness check against a pure-JAX reference.
    ref_xu, ref_miu, ref_lv = _ref_forward(
        x, w_miu, b_miu, w_var, b_var, w_dec, b_dec)
    assert jnp.allclose(x_u, ref_xu, atol=1e-4, rtol=1e-4)
    assert jnp.allclose(miu, ref_miu, atol=1e-4, rtol=1e-4)
    assert jnp.allclose(log_var, ref_lv, atol=1e-4, rtol=1e-4)

    print("KERNEL_OK")
</pallas_src>

<mosaic_0001>
module attributes {stable_mosaic.version = 11 : i64} {
  func.func @_vae_kernel(%arg0: i32, %arg1: memref<256x256xf32, #tpu.memory_space<vmem>>, %arg2: memref<256x256xf32, #tpu.memory_space<vmem>>, %arg3: memref<1x256xf32, #tpu.memory_space<vmem>>, %arg4: memref<128x256xf32, #tpu.memory_space<vmem>>, %arg5: memref<1x256xf32, #tpu.memory_space<vmem>>, %arg6: memref<256x256xf32, #tpu.memory_space<vmem>>, %arg7: memref<256x128xf32, #tpu.memory_space<vmem>>, %arg8: memref<256x128xf32, #tpu.memory_space<vmem>>) attributes {dimension_semantics = [#tpu.dimension_semantics<parallel>], iteration_bounds = array<i64: 2>, scalar_prefetch = 0 : i64, scratch_operands = 0 : i64, tpu.core_type = #tpu.core_type<tc>, window_params = [{transform_indices = @transform_0, window_bounds = array<i64: 256, 256>}, {pipeline_mode = #tpu.pipeline_mode<synchronous>, transform_indices = @transform_1, window_bounds = array<i64: 256, 256>}, {pipeline_mode = #tpu.pipeline_mode<synchronous>, transform_indices = @transform_2, window_bounds = array<i64: 1, 256>}, {pipeline_mode = #tpu.pipeline_mode<synchronous>, transform_indices = @transform_3, window_bounds = array<i64: 128, 256>}, {pipeline_mode = #tpu.pipeline_mode<synchronous>, transform_indices = @transform_4, window_bounds = array<i64: 1, 256>}, {transform_indices = @transform_5, window_bounds = array<i64: 256, 256>}, {transform_indices = @transform_6, window_bounds = array<i64: 256, 128>}, {transform_indices = @transform_7, window_bounds = array<i64: 256, 128>}]} {
    %c0 = arith.constant 0 : index
    %c0_0 = arith.constant 0 : index
    %0 = vector.load %arg1[%c0, %c0_0] : memref<256x256xf32, #tpu.memory_space<vmem>>, vector<256x256xf32>
    %c0_1 = arith.constant 0 : index
    %c0_2 = arith.constant 0 : index
    %1 = vector.load %arg2[%c0_1, %c0_2] : memref<256x256xf32, #tpu.memory_space<vmem>>, vector<256x256xf32>
    %cst = arith.constant dense<0.000000e+00> : vector<256x256xf32>
    %2 = tpu.matmul %0, %1, %cst {dimension_numbers = #tpu.dot_dimension_numbers<[1], [0], [0], [1], [0, 0, 1, 1], [], []>} : vector<256x256xf32>, vector<256x256xf32>, vector<256x256xf32> -> vector<256x256xf32>
    %c0_3 = arith.constant 0 : index
    %c0_4 = arith.constant 0 : index
    %3 = vector.load %arg3[%c0_3, %c0_4] : memref<1x256xf32, #tpu.memory_space<vmem>>, vector<1x256xf32>
    %4 = vector.broadcast %3 : vector<1x256xf32> to vector<256x256xf32>
    %5 = arith.addf %2, %4 : vector<256x256xf32>
    %6 = vector.extract_strided_slice %5 {offsets = [0, 0], sizes = [256, 128], strides = [1, 1]} : vector<256x256xf32> to vector<256x128xf32>
    %7 = vector.extract_strided_slice %5 {offsets = [0, 128], sizes = [256, 128], strides = [1, 1]} : vector<256x256xf32> to vector<256x128xf32>
    %c0_5 = arith.constant 0 : index
    %c0_6 = arith.constant 0 : index
    %8 = vector.load %arg4[%c0_5, %c0_6] : memref<128x256xf32, #tpu.memory_space<vmem>>, vector<128x256xf32>
    %cst_7 = arith.constant dense<0.000000e+00> : vector<256x256xf32>
    %9 = tpu.matmul %6, %8, %cst_7 {dimension_numbers = #tpu.dot_dimension_numbers<[1], [0], [0], [1], [0, 0, 1, 1], [], []>} : vector<256x128xf32>, vector<128x256xf32>, vector<256x256xf32> -> vector<256x256xf32>
    %c0_8 = arith.constant 0 : index
    %c0_9 = arith.constant 0 : index
    %10 = vector.load %arg5[%c0_8, %c0_9] : memref<1x256xf32, #tpu.memory_space<vmem>>, vector<1x256xf32>
    %11 = vector.broadcast %10 : vector<1x256xf32> to vector<256x256xf32>
    %12 = arith.addf %9, %11 : vector<256x256xf32>
    %c0_10 = arith.constant 0 : index
    %c0_11 = arith.constant 0 : index
    %13 = vector.load %arg7[%c0_10, %c0_11] : memref<256x128xf32, #tpu.memory_space<vmem>>, vector<256x128xf32>
    tpu.vector_store %arg7[%c0_10, %c0_11], %6 {strides = array<i32>} : memref<256x128xf32, #tpu.memory_space<vmem>>, vector<256x128xf32>,
    %c0_12 = arith.constant 0 : index
    %c0_13 = arith.constant 0 : index
    %14 = vector.load %arg8[%c0_12, %c0_13] : memref<256x128xf32, #tpu.memory_space<vmem>>, vector<256x128xf32>
    tpu.vector_store %arg8[%c0_12, %c0_13], %7 {strides = array<i32>} : memref<256x128xf32, #tpu.memory_space<vmem>>, vector<256x128xf32>,
    %c0_14 = arith.constant 0 : index
    %c0_15 = arith.constant 0 : index
    %15 = vector.load %arg6[%c0_14, %c0_15] : memref<256x256xf32, #tpu.memory_space<vmem>>, vector<256x256xf32>
    tpu.vector_store %arg6[%c0_14, %c0_15], %12 {strides = array<i32>} : memref<256x256xf32, #tpu.memory_space<vmem>>, vector<256x256xf32>,
    return
  }
  func.func @transform_0(%arg0: i32) -> (i32, i32) {
    %c0_i32 = arith.constant 0 : i32
    %c0_i32_0 = arith.constant 0 : i32
    return %arg0, %c0_i32 : i32, i32
  }
  func.func @transform_1(%arg0: i32) -> (i32, i32) {
    %c0_i32 = arith.constant 0 : i32
    %c0_i32_0 = arith.constant 0 : i32
    %c0_i32_1 = arith.constant 0 : i32
    return %c0_i32, %c0_i32_0 : i32, i32
  }
  func.func @transform_2(%arg0: i32) -> (i32, i32) {
    %c0_i32 = arith.constant 0 : i32
    %c0_i32_0 = arith.constant 0 : i32
    %c0_i32_1 = arith.constant 0 : i32
    return %c0_i32, %c0_i32_0 : i32, i32
  }
  func.func @transform_3(%arg0: i32) -> (i32, i32) {
    %c0_i32 = arith.constant 0 : i32
    %c0_i32_0 = arith.constant 0 : i32
    %c0_i32_1 = arith.constant 0 : i32
    return %c0_i32, %c0_i32_0 : i32, i32
  }
  func.func @transform_4(%arg0: i32) -> (i32, i32) {
    %c0_i32 = arith.constant 0 : i32
    %c0_i32_0 = arith.constant 0 : i32
    %c0_i32_1 = arith.constant 0 : i32
    return %c0_i32, %c0_i32_0 : i32, i32
  }
  func.func @transform_5(%arg0: i32) -> (i32, i32) {
    %c0_i32 = arith.constant 0 : i32
    %c0_i32_0 = arith.constant 0 : i32
    return %arg0, %c0_i32 : i32, i32
  }
  func.func @transform_6(%arg0: i32) -> (i32, i32) {
    %c0_i32 = arith.constant 0 : i32
    %c0_i32_0 = arith.constant 0 : i32
    return %arg0, %c0_i32 : i32, i32
  }
  func.func @transform_7(%arg0: i32) -> (i32, i32) {
    %c0_i32 = arith.constant 0 : i32
    %c0_i32_0 = arith.constant 0 : i32
    return %arg0, %c0_i32 : i32, i32
  }
}

</mosaic_0001>

<llo_original>
// kernel: tpu_custom_call.1
$region0: #{tpu_custom_call.1}
  #allocation0 [shape = 'u32[]', space=smem, size = 0x4, offset = 0x4, fixed_abs, tag = 'smem constant byte address 0x4 - core index']
  #allocation1 [shape = 'u32[144,128]{1,0:T(1,128)}', space=vmem, size = 0x12000, scoped, tag = 'internal scratch']
  %s0 = inlined_call_operand.hbm [shape: f32[512,256], index: 0, kind: input, shape index: {}]
  %s1 = inlined_call_operand.hbm [shape: f32[256,256], index: 1, kind: input, shape index: {}]
  %s2 = inlined_call_operand.vmem [shape: f32[1,256], index: 2, kind: input, shape index: {}]
  %s3 = inlined_call_operand.hbm [shape: f32[128,256], index: 3, kind: input, shape index: {}]
  %s4 = inlined_call_operand.vmem [shape: f32[1,256], index: 4, kind: input, shape index: {}]
  %s5 = inlined_call_operand.hbm [shape: f32[512,256], index: 5, kind: output, shape index: {0}]
  %s6 = inlined_call_operand.hbm [shape: f32[512,128], index: 6, kind: output, shape index: {1}]
  %s7 = inlined_call_operand.hbm [shape: f32[512,128], index: 7, kind: output, shape index: {2}]
  %8 = xla_tuple %s5, %s6, %s7
  %s9 = sld [smem:[#allocation0]]
  $region81: #{tpu_custom_call.1} parent=0
    _
  %s11 = ssub.s32 1, %s9
  %s12 = scalar_select 0, %s11, %s9
  $region1: #{tpu_custom_call.1} parent=0
    #allocation2 [shape = 'u8[524288]{0}', space=vmem, size = 0x80000, scoped, tag = 'input window, operand 0']
    #allocation3 [shape = 's32[2]{0}', space=sflag, size = 0x8, scoped, tag = 'scoped memory for tpu_custom_call.1']
    #allocation4 [shape = 's32[2]{0}', space=sflag, size = 0x8, scoped, tag = 'scoped memory for tpu_custom_call.1']
    #allocation5 [shape = 'u8[262144]{0}', space=vmem, size = 0x40000, scoped, tag = 'input window, operand 1, single buffered']
    #allocation6 [shape = 's32[1]{0}', space=sflag, size = 0x4, scoped, tag = 'scoped memory for tpu_custom_call.1']
    #allocation7 [shape = 'u8[131072]{0}', space=vmem, size = 0x20000, scoped, tag = 'input window, operand 3, single buffered']
    #allocation8 [shape = 'u8[524288]{0}', space=vmem, size = 0x80000, scoped, tag = 'output window, operand 0']
    #allocation9 [shape = 'u8[262144]{0}', space=vmem, size = 0x40000, scoped, tag = 'output window, operand 1']
    #allocation10 [shape = 's32[2]{0}', space=sflag, size = 0x8, scoped, tag = 'scoped memory for tpu_custom_call.1']
    #allocation11 [shape = 'u8[262144]{0}', space=vmem, size = 0x40000, scoped, tag = 'output window, operand 2']
    %13 = vsyncpa [#allocation3], 0
    %s14 = scalar_lea.sflag [#allocation3], 1
    %15 = vsyncpa %s14, 0
    %16 = vsyncpa [#allocation6], 0
    %17 = vsyncpa [#allocation4], 0
    %s18 = scalar_lea.sflag [#allocation4], 1
    %19 = vsyncpa %s18, 0
    %20 = vsyncpa [#allocation10], 0
    %s21 = scalar_lea.sflag [#allocation10], 1
    %22 = vsyncpa %s21, 0
    loop: start=0, step=1, limit=4
    $region2: #{tpu_custom_call.1} parent=1 // loop_pre_header
      _
    $region3: #{tpu_custom_call.1} parent=1 // loop_header
      %s24 = sphi 0, %s28
      %p25 = scmp.ge.s32.totalorder %s24, 4
      %s34 = sphi 0, %s36
      %s37 = sphi 0, %s34
      %s38 = sphi 0, %s37
      %s54 = sphi 0, %s38
      %s58 = sphi 0, %s58
      %s60 = sphi 0, %s58
      %s61 = sphi 0, %s60
      %s75 = sphi 0, %s61
      %s79 = sphi 0, %s79
      %s81 = sphi 0, %s79
      %s82 = sphi 0, %s81
      %s96 = sphi 0, %s82
      %s100 = sphi 0, %s100
      %s102 = sphi 0, %s100
      %s103 = sphi 0, %s102
      %s117 = sphi 0, %s103
      %s121 = sphi 0, %s121
      %s123 = sphi 0, %s121
      %s124 = sphi 0, %s123
      %s138 = sphi 0, %s124
      %s144 = sphi 0, %s146
      %s147 = sphi 0, %s144
      %s148 = sphi 0, %s147
      %s164 = sphi 0, %s148
      %s170 = sphi 0, %s172
      %s173 = sphi 0, %s170
      %s174 = sphi 0, %s173
      %s190 = sphi 0, %s174
      %s196 = sphi 0, %s198
      %s199 = sphi 0, %s196
      %s200 = sphi 0, %s199
      %s216 = sphi 0, %s200
    $region4: #{tpu_custom_call.1} parent=1 // loop_header_branch
      %27 = sbr.rel (%p25) target = $region8
    $region5: #{tpu_custom_call.1} parent=1 // loop_body
      %s29 = ssub.s32 %s24, 1
      %s30 = ssub.s32 %s24, 2
      %s31 = sadd.s32 %s24, 1
      %s32 = ssub.s32 %s24, %s31
      %p33 = scmp.eq.s32.totalorder %s32, 0
      %s35 = sadd.s32 %s34, 1
      %s36 = scalar_select %p33, %s34, %s35
      %p39 = pneg %p33
      %p40 = scmp.eq.s32.totalorder %s24, 1
      %p41 = por %p39, %p40
      %p42 = scmp.ne.s32.totalorder %s34, %s37
      %p43 = scmp.eq.s32.totalorder %s24, 0
      %p44 = por %p42, %p43
      %p45 = scmp.ne.s32.totalorder %s34, %s37
      %p46 = scmp.eq.s32.totalorder %s29, 1
      %p47 = por %p45, %p46
      %p48 = scmp.ne.s32.totalorder %s37, %s38
      %p49 = scmp.eq.s32.totalorder %s29, 0
      %p50 = por %p48, %p49
      %p51 = scmp.ne.s32.totalorder %s37, %s38
      %p52 = scmp.eq.s32.totalorder %s30, 1
      %p53 = por %p51, %p52
      %p55 = scmp.ne.s32.totalorder %s38, %s54
      %p56 = scmp.eq.s32.totalorder %s30, 0
      %p57 = por %p55, %p56
      %s59 = sadd.s32 %s58, 1
      %p62 = scmp.eq.s32.totalorder %s24, 1
      %p63 = scmp.ne.s32.totalorder %s58, %s60
      %p64 = scmp.eq.s32.totalorder %s24, 0
      %p65 = por %p63, %p64
      %p66 = scmp.ne.s32.totalorder %s58, %s60
      %p67 = scmp.eq.s32.totalorder %s29, 1
      %p68 = por %p66, %p67
      %p69 = scmp.ne.s32.totalorder %s60, %s61
      %p70 = scmp.eq.s32.totalorder %s29, 0
      %p71 = por %p69, %p70
      %p72 = scmp.ne.s32.totalorder %s60, %s61
      %p73 = scmp.eq.s32.totalorder %s30, 1
      %p74 = por %p72, %p73
      %p76 = scmp.ne.s32.totalorder %s61, %s75
      %p77 = scmp.eq.s32.totalorder %s30, 0
      %p78 = por %p76, %p77
      %s80 = sadd.s32 %s79, 1
      %p83 = scmp.eq.s32.totalorder %s24, 1
      %p84 = scmp.ne.s32.totalorder %s79, %s81
      %p85 = scmp.eq.s32.totalorder %s24, 0
      %p86 = por %p84, %p85
      %p87 = scmp.ne.s32.totalorder %s79, %s81
      %p88 = scmp.eq.s32.totalorder %s29, 1
      %p89 = por %p87, %p88
      %p90 = scmp.ne.s32.totalorder %s81, %s82
      %p91 = scmp.eq.s32.totalorder %s29, 0
      %p92 = por %p90, %p91
      %p93 = scmp.ne.s32.totalorder %s81, %s82
      %p94 = scmp.eq.s32.totalorder %s30, 1
      %p95 = por %p93, %p94
      %p97 = scmp.ne.s32.totalorder %s82, %s96
      %p98 = scmp.eq.s32.totalorder %s30, 0
      %p99 = por %p97, %p98
      %s101 = sadd.s32 %s100, 1
      %p104 = scmp.eq.s32.totalorder %s24, 1
      %p105 = scmp.ne.s32.totalorder %s100, %s102
      %p106 = scmp.eq.s32.totalorder %s24, 0
      %p107 = por %p105, %p106
      %p108 = scmp.ne.s32.totalorder %s100, %s102
      %p109 = scmp.eq.s32.totalorder %s29, 1
      %p110 = por %p108, %p109
      %p111 = scmp.ne.s32.totalorder %s102, %s103
      %p112 = scmp.eq.s32.totalorder %s29, 0
      %p113 = por %p111, %p112
      %p114 = scmp.ne.s32.totalorder %s102, %s103
      %p115 = scmp.eq.s32.totalorder %s30, 1
      %p116 = por %p114, %p115
      %p118 = scmp.ne.s32.totalorder %s103, %s117
      %p119 = scmp.eq.s32.totalorder %s30, 0
      %p120 = por %p118, %p119
      %s122 = sadd.s32 %s121, 1
      %p125 = scmp.eq.s32.totalorder %s24, 1
      %p126 = scmp.ne.s32.totalorder %s121, %s123
      %p127 = scmp.eq.s32.totalorder %s24, 0
      %p128 = por %p126, %p127
      %p129 = scmp.ne.s32.totalorder %s121, %s123
      %p130 = scmp.eq.s32.totalorder %s29, 1
      %p131 = por %p129, %p130
      %p132 = scmp.ne.s32.totalorder %s123, %s124
      %p133 = scmp.eq.s32.totalorder %s29, 0
      %p134 = por %p132, %p133
      %p135 = scmp.ne.s32.totalorder %s123, %s124
      %p136 = scmp.eq.s32.totalorder %s30, 1
      %p137 = por %p135, %p136
      %p139 = scmp.ne.s32.totalorder %s124, %s138
      %p140 = scmp.eq.s32.totalorder %s30, 0
      %p141 = por %p139, %p140
      %s142 = ssub.s32 %s24, %s31
      %p143 = scmp.eq.s32.totalorder %s142, 0
      %s145 = sadd.s32 %s144, 1
      %s146 = scalar_select %p143, %s144, %s145
      %p149 = pneg %p143
      %p150 = scmp.eq.s32.totalorder %s24, 1
      %p151 = por %p149, %p150
      %p152 = scmp.ne.s32.totalorder %s144, %s147
      %p153 = scmp.eq.s32.totalorder %s24, 0
      %p154 = por %p152, %p153
      %p155 = scmp.ne.s32.totalorder %s144, %s147
      %p156 = scmp.eq.s32.totalorder %s29, 1
      %p157 = por %p155, %p156
      %p158 = scmp.ne.s32.totalorder %s147, %s148
      %p159 = scmp.eq.s32.totalorder %s29, 0
      %p160 = por %p158, %p159
      %p161 = scmp.ne.s32.totalorder %s147, %s148
      %p162 = scmp.eq.s32.totalorder %s30, 1
      %p163 = por %p161, %p162
      %p165 = scmp.ne.s32.totalorder %s148, %s164
      %p166 = scmp.eq.s32.totalorder %s30, 0
      %p167 = por %p165, %p166
      %s168 = ssub.s32 %s24, %s31
      %p169 = scmp.eq.s32.totalorder %s168, 0
      %s171 = sadd.s32 %s170, 1
      %s172 = scalar_select %p169, %s170, %s171
      %p175 = pneg %p169
      %p176 = scmp.eq.s32.totalorder %s24, 1
      %p177 = por %p175, %p176
      %p178 = scmp.ne.s32.totalorder %s170, %s173
      %p179 = scmp.eq.s32.totalorder %s24, 0
      %p180 = por %p178, %p179
      %p181 = scmp.ne.s32.totalorder %s170, %s173
      %p182 = scmp.eq.s32.totalorder %s29, 1
      %p183 = por %p181, %p182
      %p184 = scmp.ne.s32.totalorder %s173, %s174
      %p185 = scmp.eq.s32.totalorder %s29, 0
      %p186 = por %p184, %p185
      %p187 = scmp.ne.s32.totalorder %s173, %s174
      %p188 = scmp.eq.s32.totalorder %s30, 1
      %p189 = por %p187, %p188
      %p191 = scmp.ne.s32.totalorder %s174, %s190
      %p192 = scmp.eq.s32.totalorder %s30, 0
      %p193 = por %p191, %p192
      %s194 = ssub.s32 %s24, %s31
      %p195 = scmp.eq.s32.totalorder %s194, 0
      %s197 = sadd.s32 %s196, 1
      %s198 = scalar_select %p195, %s196, %s197
      %p201 = pneg %p195
      %p202 = scmp.eq.s32.totalorder %s24, 1
      %p203 = por %p201, %p202
      %p204 = scmp.ne.s32.totalorder %s196, %s199
      %p205 = scmp.eq.s32.totalorder %s24, 0
      %p206 = por %p204, %p205
      %p207 = scmp.ne.s32.totalorder %s196, %s199
      %p208 = scmp.eq.s32.totalorder %s29, 1
      %p209 = por %p207, %p208
      %p210 = scmp.ne.s32.totalorder %s199, %s200
      %p211 = scmp.eq.s32.totalorder %s29, 0
      %p212 = por %p210, %p211
      %p213 = scmp.ne.s32.totalorder %s199, %s200
      %p214 = scmp.eq.s32.totalorder %s30, 1
      %p215 = por %p213, %p214
      %p217 = scmp.ne.s32.totalorder %s200, %s216
      %p218 = scmp.eq.s32.totalorder %s30, 0
      %p219 = por %p217, %p218
      %p220 = scmp.le.s32.totalorder 1, %s24
      %p221 = scmp.lt.s32.totalorder %s24, 3
      %p222 = pnand %p220, %p221
      %p223 = pneg %p222
      // Predicated region
      $region9: #{tpu_custom_call.1} parent=5 // pred_check
        _
      $region10: #{tpu_custom_call.1} parent=5 // pred_check_branch
        %225 = sbr.rel (%p222) target = $region12
      $region11: #{tpu_custom_call.1} parent=5 // pred_region
        %s226 = ssub.s32 %s24, 1
        // Predicated region
        $region13: #{tpu_custom_call.1} parent=11 // pred_check
          %p227 = pneg %p71
        $region14: #{tpu_custom_call.1} parent=11 // pred_check_branch
          %229 = sbr.rel (%p227) target = $region16
        $region15: #{tpu_custom_call.1} parent=11 // pred_region
          %s231 = ssub.s32 8192, 8192
          %232 = vsyncadd [#allocation6], %s231
          %s233 = sshll.u32 [#allocation5], 4
          %s234 = int_to_ptr.vmem [resolvable:$true] %s233
          %239 = dma.hbm_to_vmem [thread:$0]  %s1, 8192, %s234, [#allocation6], 256, 256, 16
        $region16: #{tpu_custom_call.1} parent=11 // pred_fallthru
          _
        // Predicated region
        $region17: #{tpu_custom_call.1} parent=11 // pred_check
          %p240 = pneg %p92
        $region18: #{tpu_custom_call.1} parent=11 // pred_check_branch
          %242 = sbr.rel (%p240) target = $region20
        $region19: #{tpu_custom_call.1} parent=11 // pred_region
          _
        $region20: #{tpu_custom_call.1} parent=11 // pred_fallthru
          _
        // Predicated region
        $region21: #{tpu_custom_call.1} parent=11 // pred_check
          %p243 = pneg %p113
        $region22: #{tpu_custom_call.1} parent=11 // pred_check_branch
          %245 = sbr.rel (%p243) target = $region24
        $region23: #{tpu_custom_call.1} parent=11 // pred_region
          %s247 = ssub.s32 4096, 4096
          %248 = vsyncadd [#allocation6], %s247
          %s249 = sshll.u32 [#allocation7], 4
          %s250 = int_to_ptr.vmem [resolvable:$true] %s249
          %255 = dma.hbm_to_vmem [thread:$0]  %s3, 4096, %s250, [#allocation6], 256, 256, 16
        $region24: #{tpu_custom_call.1} parent=11 // pred_fallthru
          _
        // Predicated region
        $region25: #{tpu_custom_call.1} parent=11 // pred_check
          %p256 = pneg %p134
        $region26: #{tpu_custom_call.1} parent=11 // pred_check_branch
          %258 = sbr.rel (%p256) target = $region28
        $region27: #{tpu_custom_call.1} parent=11 // pred_region
          _
        $region28: #{tpu_custom_call.1} parent=11 // pred_fallthru
          _
      $region12: #{tpu_custom_call.1} parent=5 // pred_fallthru
        _
      %p259 = scmp.lt.s32.totalorder %s24, 2
      // Predicated region
      $region29: #{tpu_custom_call.1} parent=5 // pred_check
        %p260 = pneg %p259
      $region30: #{tpu_custom_call.1} parent=5 // pred_check_branch
        %262 = sbr.rel (%p260) target = $region32
      $region31: #{tpu_custom_call.1} parent=5 // pred_region
        // Predicated region
        $region33: #{tpu_custom_call.1} parent=31 // pred_check
          %p263 = pneg %p44
        $region34: #{tpu_custom_call.1} parent=31 // pred_check_branch
          %265 = sbr.rel (%p263) target = $region36
        $region35: #{tpu_custom_call.1} parent=31 // pred_region
          %s266 = sand.u32 %s34, 1
          %s267 = scalar_lea.sflag [#allocation3], %s266
          %s268 = sand.u32 %s34, 1
          %s269 = smul.addr %s268, 512
          %s270 = scalar_lea.vmem [#allocation2], %s269
          %s271 = smul.u32 32, %s24
          %s273 = ssub.s32 8192, 8192
          %274 = vsyncadd %s267, %s273
          %s275 = smul.addr %s271, 2
          %s276 = smul.addr %s275, 128
          %s277 = scalar_lea.hbm %s0, %s276
          %s278 = sshll.u32 %s270, 4
          %s279 = int_to_ptr.vmem [resolvable:$true] %s278
          %284 = dma.hbm_to_vmem [thread:$0]  %s277, 8192, %s279, %s267, 256, 256, 16
        $region36: #{tpu_custom_call.1} parent=31 // pred_fallthru
          _
      $region32: #{tpu_custom_call.1} parent=5 // pred_fallthru
        _
      %p285 = scmp.le.s32.totalorder 1, %s24
      %p286 = scmp.lt.s32.totalorder %s24, 3
      %p287 = pnand %p285, %p286
      %p288 = pneg %p287
      // Predicated region
      $region37: #{tpu_custom_call.1} parent=5 // pred_check
        _
      $region38: #{tpu_custom_call.1} parent=5 // pred_check_branch
        %290 = sbr.rel (%p287) target = $region40
      $region39: #{tpu_custom_call.1} parent=5 // pred_region
        %s291 = ssub.s32 %s24, 1
        %s292 = sand.u32 %s37, 1
        %s293 = scalar_lea.sflag [#allocation3], %s292
        %s294 = sand.u32 %s37, 1
        %s295 = smul.addr %s294, 512
        %s296 = scalar_lea.vmem [#allocation2], %s295
        // Predicated region
        $region41: #{tpu_custom_call.1} parent=39 // pred_check
          %p297 = pneg %p50
        $region42: #{tpu_custom_call.1} parent=39 // pred_check_branch
          %299 = sbr.rel (%p297) target = $region44
        $region43: #{tpu_custom_call.1} parent=39 // pred_region
          %300 = dma.done %s293, 8192
        $region44: #{tpu_custom_call.1} parent=39 // pred_fallthru
          _
        // Predicated region
        $region45: #{tpu_custom_call.1} parent=39 // pred_check
          %p301 = pneg %p71
        $region46: #{tpu_custom_call.1} parent=39 // pred_check_branch
          %303 = sbr.rel (%p301) target = $region48
        $region47: #{tpu_custom_call.1} parent=39 // pred_region
          %304 = dma.done [#allocation6], 8192
        $region48: #{tpu_custom_call.1} parent=39 // pred_fallthru
          _
        // Predicated region
        $region49: #{tpu_custom_call.1} parent=39 // pred_check
          %p305 = pneg %p113
        $region50: #{tpu_custom_call.1} parent=39 // pred_check_branch
          %307 = sbr.rel (%p305) target = $region52
        $region51: #{tpu_custom_call.1} parent=39 // pred_region
          %308 = dma.done [#allocation6], 4096
        $region52: #{tpu_custom_call.1} parent=39 // pred_fallthru
          _
        %s309 = sand.u32 %s37, 1
        %s310 = scalar_lea.sflag [#allocation3], %s309
        %s311 = sand.u32 %s37, 1
        %s312 = smul.addr %s311, 512
        %s313 = scalar_lea.vmem [#allocation2], %s312
        %p314 = pneg %p50
        %p315 = pneg %p47
        %p316 = pneg %p71
        %p317 = pneg %p68
        %p318 = pneg %p92
        %p319 = pneg %p89
        %p320 = pneg %p113
        %p321 = pneg %p110
        %p322 = pneg %p134
        %p323 = pneg %p131
        %p324 = pneg %p160
        %p325 = pneg %p157
        %s326 = sand.u32 %s147, 1
        %s327 = scalar_lea.sflag [#allocation4], %s326
        %s328 = sand.u32 %s147, 1
        %s329 = smul.addr %s328, 512
        %s330 = scalar_lea.vmem [#allocation8], %s329
        %p331 = pneg %p186
        %p332 = pneg %p183
        %s333 = sand.u32 %s29, 1
        %s334 = scalar_lea.sflag [#allocation10], %s333
        %s335 = sand.u32 %s173, 1
        %s336 = smul.addr %s335, 256
        %s337 = scalar_lea.vmem [#allocation9], %s336
        %p338 = pneg %p212
        %p339 = pneg %p209
        %s340 = sand.u32 %s29, 1
        %s341 = scalar_lea.sflag [#allocation10], %s340
        %s342 = sand.u32 %s199, 1
        %s343 = smul.addr %s342, 256
        %s344 = scalar_lea.vmem [#allocation11], %s343
        %s345 = smul.u32 32, %s29
        %s346 = smul.u32 32, %s29
        %s347 = smul.u32 32, %s29
        %s348 = smul.u32 32, %s29
        %v349 = vld [vmem:[%s296] sm:$0xff]
        %v350 = vld [vmem:[%s296 + $0x8] sm:$0xff]
        %v351 = vld [vmem:[%s296 + $0x10] sm:$0xff]
        %v352 = vld [vmem:[%s296 + $0x18] sm:$0xff]
        %v353 = vld [vmem:[%s296 + $0x20] sm:$0xff]
        %v354 = vld [vmem:[%s296 + $0x28] sm:$0xff]
        %v355 = vld [vmem:[%s296 + $0x30] sm:$0xff]
        %v356 = vld [vmem:[%s296 + $0x38] sm:$0xff]
        %v357 = vld [vmem:[%s296 + $0x40] sm:$0xff]
        %v358 = vld [vmem:[%s296 + $0x48] sm:$0xff]
        %v359 = vld [vmem:[%s296 + $0x50] sm:$0xff]
        %v360 = vld [vmem:[%s296 + $0x58] sm:$0xff]
        %v361 = vld [vmem:[%s296 + $0x60] sm:$0xff]
        %v362 = vld [vmem:[%s296 + $0x68] sm:$0xff]
        %v363 = vld [vmem:[%s296 + $0x70] sm:$0xff]
        %v364 = vld [vmem:[%s296 + $0x78] sm:$0xff]
        %v365 = vld [vmem:[%s296 + $0x80] sm:$0xff]
        %v366 = vld [vmem:[%s296 + $0x88] sm:$0xff]
        %v367 = vld [vmem:[%s296 + $0x90] sm:$0xff]
        %v368 = vld [vmem:[%s296 + $0x98] sm:$0xff]
        %v369 = vld [vmem:[%s296 + $0xa0] sm:$0xff]
        %v370 = vld [vmem:[%s296 + $0xa8] sm:$0xff]
        %v371 = vld [vmem:[%s296 + $0xb0] sm:$0xff]
        %v372 = vld [vmem:[%s296 + $0xb8] sm:$0xff]
        %v373 = vld [vmem:[%s296 + $0xc0] sm:$0xff]
        %v374 = vld [vmem:[%s296 + $0xc8] sm:$0xff]
        %v375 = vld [vmem:[%s296 + $0xd0] sm:$0xff]
        %v376 = vld [vmem:[%s296 + $0xd8] sm:$0xff]
        %v377 = vld [vmem:[%s296 + $0xe0] sm:$0xff]
        %v378 = vld [vmem:[%s296 + $0xe8] sm:$0xff]
        %v379 = vld [vmem:[%s296 + $0xf0] sm:$0xff]
        %v380 = vld [vmem:[%s296 + $0xf8] sm:$0xff]
        %v381 = vld [vmem:[%s296 + $0x100] sm:$0xff]
        %v382 = vld [vmem:[%s296 + $0x108] sm:$0xff]
        %v383 = vld [vmem:[%s296 + $0x110] sm:$0xff]
        %v384 = vld [vmem:[%s296 + $0x118] sm:$0xff]
        %v385 = vld [vmem:[%s296 + $0x120] sm:$0xff]
        %v386 = vld [vmem:[%s296 + $0x128] sm:$0xff]
        %v387 = vld [vmem:[%s296 + $0x130] sm:$0xff]
        %v388 = vld [vmem:[%s296 + $0x138] sm:$0xff]
        %v389 = vld [vmem:[%s296 + $0x140] sm:$0xff]
        %v390 = vld [vmem:[%s296 + $0x148] sm:$0xff]
        %v391 = vld [vmem:[%s296 + $0x150] sm:$0xff]
        %v392 = vld [vmem:[%s296 + $0x158] sm:$0xff]
        %v393 = vld [vmem:[%s296 + $0x160] sm:$0xff]
        %v394 = vld [vmem:[%s296 + $0x168] sm:$0xff]
        %v395 = vld [vmem:[%s296 + $0x170] sm:$0xff]
        %v396 = vld [vmem:[%s296 + $0x178] sm:$0xff]
        %v397 = vld [vmem:[%s296 + $0x180] sm:$0xff]
        %v398 = vld [vmem:[%s296 + $0x188] sm:$0xff]
        %v399 = vld [vmem:[%s296 + $0x190] sm:$0xff]
        %v400 = vld [vmem:[%s296 + $0x198] sm:$0xff]
        %v401 = vld [vmem:[%s296 + $0x1a0] sm:$0xff]
        %v402 = vld [vmem:[%s296 + $0x1a8] sm:$0xff]
        %v403 = vld [vmem:[%s296 + $0x1b0] sm:$0xff]
        %v404 = vld [vmem:[%s296 + $0x1b8] sm:$0xff]
        %v405 = vld [vmem:[%s296 + $0x1c0] sm:$0xff]
        %v406 = vld [vmem:[%s296 + $0x1c8] sm:$0xff]
        %v407 = vld [vmem:[%s296 + $0x1d0] sm:$0xff]
        %v408 = vld [vmem:[%s296 + $0x1d8] sm:$0xff]
        %v409 = vld [vmem:[%s296 + $0x1e0] sm:$0xff]
        %v410 = vld [vmem:[%s296 + $0x1e8] sm:$0xff]
        %v411 = vld [vmem:[%s296 + $0x1f0] sm:$0xff]
        %v412 = vld [vmem:[%s296 + $0x1f8] sm:$0xff]
        %v413 = vld [vmem:[#allocation5] sm:$0xff]
        %v414 = vld [vmem:[#allocation5 + $0x8] sm:$0xff]
        %v415 = vld [vmem:[#allocation5 + $0x10] sm:$0xff]
        %v416 = vld [vmem:[#allocation5 + $0x18] sm:$0xff]
        %v417 = vld [vmem:[#allocation5 + $0x20] sm:$0xff]
        %v418 = vld [vmem:[#allocation5 + $0x28] sm:$0xff]
        %v419 = vld [vmem:[#allocation5 + $0x30] sm:$0xff]
        %v420 = vld [vmem:[#allocation5 + $0x38] sm:$0xff]
        %v421 = vld [vmem:[#allocation5 + $0x40] sm:$0xff]
        %v422 = vld [vmem:[#allocation5 + $0x48] sm:$0xff]
        %v423 = vld [vmem:[#allocation5 + $0x50] sm:$0xff]
        %v424 = vld [vmem:[#allocation5 + $0x58] sm:$0xff]
        %v425 = vld [vmem:[#allocation5 + $0x60] sm:$0xff]
        %v426 = vld [vmem:[#allocation5 + $0x68] sm:$0xff]
        %v427 = vld [vmem:[#allocation5 + $0x70] sm:$0xff]
        %v428 = vld [vmem:[#allocation5 + $0x78] sm:$0xff]
        %v429 = vld [vmem:[#allocation5 + $0x80] sm:$0xff]
        %v430 = vld [vmem:[#allocation5 + $0x88] sm:$0xff]
        %v431 = vld [vmem:[#allocation5 + $0x90] sm:$0xff]
        %v432 = vld [vmem:[#allocation5 + $0x98] sm:$0xff]
        %v433 = vld [vmem:[#allocation5 + $0xa0] sm:$0xff]
        %v434 = vld [vmem:[#allocation5 + $0xa8] sm:$0xff]
        %v435 = vld [vmem:[#allocation5 + $0xb0] sm:$0xff]
        %v436 = vld [vmem:[#allocation5 + $0xb8] sm:$0xff]
        %v437 = vld [vmem:[#allocation5 + $0xc0] sm:$0xff]
        %v438 = vld [vmem:[#allocation5 + $0xc8] sm:$0xff]
        %v439 = vld [vmem:[#allocation5 + $0xd0] sm:$0xff]
        %v440 = vld [vmem:[#allocation5 + $0xd8] sm:$0xff]
        %v441 = vld [vmem:[#allocation5 + $0xe0] sm:$0xff]
        %v442 = vld [vmem:[#allocation5 + $0xe8] sm:$0xff]
        %v443 = vld [vmem:[#allocation5 + $0xf0] sm:$0xff]
        %v444 = vld [vmem:[#allocation5 + $0xf8] sm:$0xff]
        %v445 = vld [vmem:[#allocation5 + $0x100] sm:$0xff]
        %v446 = vld [vmem:[#allocation5 + $0x108] sm:$0xff]
        %v447 = vld [vmem:[#allocation5 + $0x110] sm:$0xff]
        %v448 = vld [vmem:[#allocation5 + $0x118] sm:$0xff]
        %v449 = vld [vmem:[#allocation5 + $0x120] sm:$0xff]
        %v450 = vld [vmem:[#allocation5 + $0x128] sm:$0xff]
        %v451 = vld [vmem:[#allocation5 + $0x130] sm:$0xff]
        %v452 = vld [vmem:[#allocation5 + $0x138] sm:$0xff]
        %v453 = vld [vmem:[#allocation5 + $0x140] sm:$0xff]
        %v454 = vld [vmem:[#allocation5 + $0x148] sm:$0xff]
        %v455 = vld [vmem:[#allocation5 + $0x150] sm:$0xff]
        %v456 = vld [vmem:[#allocation5 + $0x158] sm:$0xff]
        %v457 = vld [vmem:[#allocation5 + $0x160] sm:$0xff]
        %v458 = vld [vmem:[#allocation5 + $0x168] sm:$0xff]
        %v459 = vld [vmem:[#allocation5 + $0x170] sm:$0xff]
        %v460 = vld [vmem:[#allocation5 + $0x178] sm:$0xff]
        %v461 = vld [vmem:[#allocation5 + $0x180] sm:$0xff]
        %v462 = vld [vmem:[#allocation5 + $0x188] sm:$0xff]
        %v463 = vld [vmem:[#allocation5 + $0x190] sm:$0xff]
        %v464 = vld [vmem:[#allocation5 + $0x198] sm:$0xff]
        %v465 = vld [vmem:[#allocation5 + $0x1a0] sm:$0xff]
        %v466 = vld [vmem:[#allocation5 + $0x1a8] sm:$0xff]
        %v467 = vld [vmem:[#allocation5 + $0x1b0] sm:$0xff]
        %v468 = vld [vmem:[#allocation5 + $0x1b8] sm:$0xff]
        %v469 = vld [vmem:[#allocation5 + $0x1c0] sm:$0xff]
        %v470 = vld [vmem:[#allocation5 + $0x1c8] sm:$0xff]
        %v471 = vld [vmem:[#allocation5 + $0x1d0] sm:$0xff]
        %v472 = vld [vmem:[#allocation5 + $0x1d8] sm:$0xff]
        %v473 = vld [vmem:[#allocation5 + $0x1e0] sm:$0xff]
        %v474 = vld [vmem:[#allocation5 + $0x1e8] sm:$0xff]
        %v475 = vld [vmem:[#allocation5 + $0x1f0] sm:$0xff]
        %v476 = vld [vmem:[#allocation5 + $0x1f8] sm:$0xff]
        %v477 = vld [vmem:[%s2] sm:$0x3]
        %v479 = vlaneseq
        %v480 = vshrl.u32 %v479, 7
        %v481 = vsub.s32 0, %v480
        %v482 = vrot.slane %v477, %v481
        %v483 = vlaneseq
        %v484 = vshrl.u32 %v483, 7
        %v485 = vsub.s32 1, %v484
        %v486 = vrot.slane %v477, %v485
        %489 = vmatprep.subr.mxu0 %v414
        %490 = vmatpush1.msra.mxu0 %v413
        %491 = vmatprep.subr.mxu0 %v416
        %492 = vmatpush1.msra.mxu0 %v415
        %493 = vmatprep.subr.mxu0 %v418
        %494 = vmatpush1.msra.mxu0 %v417
        %495 = vmatprep.subr.mxu0 %v420
        %496 = vmatpush1.msra.mxu0 %v419
        %497 = vmatprep.subr.mxu0 %v422
        %498 = vmatpush1.msra.mxu0 %v421
        %499 = vmatprep.subr.mxu0 %v424
        %500 = vmatpush1.msra.mxu0 %v423
        %501 = vmatprep.subr.mxu0 %v426
        %502 = vmatpush1.msra.mxu0 %v425
        %503 = vmatprep.subr.mxu0 %v428
        %504 = vmatpush1.msra.mxu0 %v427
        %505 = vmatprep.subr.mxu0 %v430
        %506 = vmatpush1.msra.mxu0 %v429
        %507 = vmatprep.subr.mxu0 %v432
        %508 = vmatpush1.msra.mxu0 %v431
        %509 = vmatprep.subr.mxu0 %v434
        %510 = vmatpush1.msra.mxu0 %v433
        %511 = vmatprep.subr.mxu0 %v436
        %512 = vmatpush1.msra.mxu0 %v435
        %513 = vmatprep.subr.mxu0 %v438
        %514 = vmatpush1.msra.mxu0 %v437
        %515 = vmatprep.subr.mxu0 %v440
        %516 = vmatpush1.msra.mxu0 %v439
        %517 = vmatprep.subr.mxu0 %v442
        %518 = vmatpush1.msra.mxu0 %v441
        %519 = vmatprep.subr.mxu0 %v444
        %520 = vmatpush1.msra.mxu0 %v443
        %521 = vmatprep.subr.mxu0 %v446
        %522 = vmatpush1.msra.mxu0 %v445
        %523 = vmatprep.subr.mxu0 %v448
        %524 = vmatpush1.msra.mxu0 %v447
        %525 = vmatprep.subr.mxu0 %v450
        %526 = vmatpush1.msra.mxu0 %v449
        %527 = vmatprep.subr.mxu0 %v452
        %528 = vmatpush1.msra.mxu0 %v451
        %529 = vmatprep.subr.mxu0 %v454
        %530 = vmatpush1.msra.mxu0 %v453
        %531 = vmatprep.subr.mxu0 %v456
        %532 = vmatpush1.msra.mxu0 %v455
        %533 = vmatprep.subr.mxu0 %v458
        %534 = vmatpush1.msra.mxu0 %v457
        %535 = vmatprep.subr.mxu0 %v460
        %536 = vmatpush1.msra.mxu0 %v459
        %537 = vmatprep.subr.mxu0 %v462
        %538 = vmatpush1.msra.mxu0 %v461
        %539 = vmatprep.subr.mxu0 %v464
        %540 = vmatpush1.msra.mxu0 %v463
        %541 = vmatprep.subr.mxu0 %v466
        %542 = vmatpush1.msra.mxu0 %v465
        %543 = vmatprep.subr.mxu0 %v468
        %544 = vmatpush1.msra.mxu0 %v467
        %545 = vmatprep.subr.mxu0 %v470
        %546 = vmatpush1.msra.mxu0 %v469
        %547 = vmatprep.subr.mxu0 %v472
        %548 = vmatpush1.msra.mxu0 %v471
        %549 = vmatprep.subr.mxu0 %v474
        %550 = vmatpush1.msra.mxu0 %v473
        %551 = vmatprep.subr.mxu0 %v476
        %552 = vmatpush1.msra.mxu0 %v475
        %553 = vmatprep.mubr.f32.mxu0 %v350
        %554 = vmatmul.mubr.f32.gmra.mrb[0].mxu0 %v349
        %v555 = vpop.f32.mrb[0].mxu0
        %v556 = vadd.f32 %v482, %v555
        %v557 = vpop.f32.mrb[0].mxu0
        %v558 = vadd.f32 %v486, %v557
        %559 = vmatprep.mubr.f32.mxu0 %v352
        %560 = vmatmul.mubr.f32.gmra.mrb[0].mxu0 %v351
        %v561 = vpop.f32.mrb[0].mxu0
        %v562 = vadd.f32 %v482, %v561
        %v563 = vpop.f32.mrb[0].mxu0
        %v564 = vadd.f32 %v486, %v563
        %565 = vmatprep.mubr.f32.mxu0 %v354
        %566 = vmatmul.mubr.f32.gmra.mrb[0].mxu0 %v353
        %v567 = vpop.f32.mrb[0].mxu0
        %v568 = vadd.f32 %v482, %v567
        %v569 = vpop.f32.mrb[0].mxu0
        %v570 = vadd.f32 %v486, %v569
        %571 = vmatprep.mubr.f32.mxu0 %v356
        %572 = vmatmul.mubr.f32.gmra.mrb[0].mxu0 %v355
        %v573 = vpop.f32.mrb[0].mxu0
        %v574 = vadd.f32 %v482, %v573
        %v575 = vpop.f32.mrb[0].mxu0
        %v576 = vadd.f32 %v486, %v575
        %577 = vmatprep.mubr.f32.mxu0 %v358
        %578 = vmatmul.mubr.f32.gmra.mrb[0].mxu0 %v357
        %v579 = vpop.f32.mrb[0].mxu0
        %v580 = vadd.f32 %v482, %v579
        %v581 = vpop.f32.mrb[0].mxu0
        %v582 = vadd.f32 %v486, %v581
        %583 = vmatprep.mubr.f32.mxu0 %v360
        %584 = vmatmul.mubr.f32.gmra.mrb[0].mxu0 %v359
        %v585 = vpop.f32.mrb[0].mxu0
        %v586 = vadd.f32 %v482, %v585
        %v587 = vpop.f32.mrb[0].mxu0
        %v588 = vadd.f32 %v486, %v587
        %589 = vmatprep.mubr.f32.mxu0 %v362
        %590 = vmatmul.mubr.f32.gmra.mrb[0].mxu0 %v361
        %v591 = vpop.f32.mrb[0].mxu0
        %v592 = vadd.f32 %v482, %v591
        %v593 = vpop.f32.mrb[0].mxu0
        %v594 = vadd.f32 %v486, %v593
        %595 = vmatprep.mubr.f32.mxu0 %v364
        %596 = vmatmul.mubr.f32.gmra.mrb[0].mxu0 %v363
        %v597 = vpop.f32.mrb[0].mxu0
        %v598 = vadd.f32 %v482, %v597
        %v599 = vpop.f32.mrb[0].mxu0
        %v600 = vadd.f32 %v486, %v599
        %601 = vmatprep.mubr.f32.mxu0 %v366
        %602 = vmatmul.mubr.f32.gmra.mrb[0].mxu0 %v365
        %v603 = vpop.f32.mrb[0].mxu0
        %v604 = vadd.f32 %v482, %v603
        %v605 = vpop.f32.mrb[0].mxu0
        %v606 = vadd.f32 %v486, %v605
        %607 = vmatprep.mubr.f32.mxu0 %v368
        %608 = vmatmul.mubr.f32.gmra.mrb[0].mxu0 %v367
        %v609 = vpop.f32.mrb[0].mxu0
        %v610 = vadd.f32 %v482, %v609
        %v611 = vpop.f32.mrb[0].mxu0
        %v612 = vadd.f32 %v486, %v611
        %613 = vmatprep.mubr.f32.mxu0 %v370
        %614 = vmatmul.mubr.f32.gmra.mrb[0].mxu0 %v369
        %v615 = vpop.f32.mrb[0].mxu0
        %v616 = vadd.f32 %v482, %v615
        %v617 = vpop.f32.mrb[0].mxu0
        %v618 = vadd.f32 %v486, %v617
        %619 = vmatprep.mubr.f32.mxu0 %v372
        %620 = vmatmul.mubr.f32.gmra.mrb[0].mxu0 %v371
        %v621 = vpop.f32.mrb[0].mxu0
        %v622 = vadd.f32 %v482, %v621
        %v623 = vpop.f32.mrb[0].mxu0
        %v624 = vadd.f32 %v486, %v623
        %625 = vmatprep.mubr.f32.mxu0 %v374
        %626 = vmatmul.mubr.f32.gmra.mrb[0].mxu0 %v373
        %v627 = vpop.f32.mrb[0].mxu0
        %v628 = vadd.f32 %v482, %v627
        %v629 = vpop.f32.mrb[0].mxu0
        %v630 = vadd.f32 %v486, %v629
        %631 = vmatprep.mubr.f32.mxu0 %v376
        %632 = vmatmul.mubr.f32.gmra.mrb[0].mxu0 %v375
        %v633 = vpop.f32.mrb[0].mxu0
        %v634 = vadd.f32 %v482, %v633
        %v635 = vpop.f32.mrb[0].mxu0
        %v636 = vadd.f32 %v486, %v635
        %637 = vmatprep.mubr.f32.mxu0 %v378
        %638 = vmatmul.mubr.f32.gmra.mrb[0].mxu0 %v377
        %v639 = vpop.f32.mrb[0].mxu0
        %v640 = vadd.f32 %v482, %v639
        %v641 = vpop.f32.mrb[0].mxu0
        %v642 = vadd.f32 %v486, %v641
        %643 = vmatprep.mubr.f32.mxu0 %v380
        %644 = vmatmul.mubr.f32.gmra.mrb[0].mxu0 %v379
        %v645 = vpop.f32.mrb[0].mxu0
        %v646 = vadd.f32 %v482, %v645
        %v647 = vpop.f32.mrb[0].mxu0
        %v648 = vadd.f32 %v486, %v647
        %649 = vmatprep.mubr.f32.mxu0 %v382
        %650 = vmatmul.mubr.f32.gmra.mrb[0].mxu0 %v381
        %v651 = vpop.f32.mrb[0].mxu0
        %v652 = vadd.f32 %v482, %v651
        %v653 = vpop.f32.mrb[0].mxu0
        %v654 = vadd.f32 %v486, %v653
        %655 = vmatprep.mubr.f32.mxu0 %v384
        %656 = vmatmul.mubr.f32.gmra.mrb[0].mxu0 %v383
        %v657 = vpop.f32.mrb[0].mxu0
        %v658 = vadd.f32 %v482, %v657
        %v659 = vpop.f32.mrb[0].mxu0
        %v660 = vadd.f32 %v486, %v659
        %661 = vmatprep.mubr.f32.mxu0 %v386
        %662 = vmatmul.mubr.f32.gmra.mrb[0].mxu0 %v385
        %v663 = vpop.f32.mrb[0].mxu0
        %v664 = vadd.f32 %v482, %v663
        %v665 = vpop.f32.mrb[0].mxu0
        %v666 = vadd.f32 %v486, %v665
        %667 = vmatprep.mubr.f32.mxu0 %v388
        %668 = vmatmul.mubr.f32.gmra.mrb[0].mxu0 %v387
        %v669 = vpop.f32.mrb[0].mxu0
        %v670 = vadd.f32 %v482, %v669
        %v671 = vpop.f32.mrb[0].mxu0
        %v672 = vadd.f32 %v486, %v671
        %673 = vmatprep.mubr.f32.mxu0 %v390
        %674 = vmatmul.mubr.f32.gmra.mrb[0].mxu0 %v389
        %v675 = vpop.f32.mrb[0].mxu0
        %v676 = vadd.f32 %v482, %v675
        %v677 = vpop.f32.mrb[0].mxu0
        %v678 = vadd.f32 %v486, %v677
        %679 = vmatprep.mubr.f32.mxu0 %v392
        %680 = vmatmul.mubr.f32.gmra.mrb[0].mxu0 %v391
        %v681 = vpop.f32.mrb[0].mxu0
        %v682 = vadd.f32 %v482, %v681
        %v683 = vpop.f32.mrb[0].mxu0
        %v684 = vadd.f32 %v486, %v683
        %685 = vmatprep.mubr.f32.mxu0 %v394
        %686 = vmatmul.mubr.f32.gmra.mrb[0].mxu0 %v393
        %v687 = vpop.f32.mrb[0].mxu0
        %v688 = vadd.f32 %v482, %v687
        %v689 = vpop.f32.mrb[0].mxu0
        %v690 = vadd.f32 %v486, %v689
        %691 = vmatprep.mubr.f32.mxu0 %v396
        %692 = vmatmul.mubr.f32.gmra.mrb[0].mxu0 %v395
        %v693 = vpop.f32.mrb[0].mxu0
        %v694 = vadd.f32 %v482, %v693
        %v695 = vpop.f32.mrb[0].mxu0
        %v696 = vadd.f32 %v486, %v695
        %697 = vmatprep.mubr.f32.mxu0 %v398
        %698 = vmatmul.mubr.f32.gmra.mrb[0].mxu0 %v397
        %v699 = vpop.f32.mrb[0].mxu0
        %v700 = vadd.f32 %v482, %v699
        %v701 = vpop.f32.mrb[0].mxu0
        %v702 = vadd.f32 %v486, %v701
        %703 = vmatprep.mubr.f32.mxu0 %v400
        %704 = vmatmul.mubr.f32.gmra.mrb[0].mxu0 %v399
        %v705 = vpop.f32.mrb[0].mxu0
        %v706 = vadd.f32 %v482, %v705
        %v707 = vpop.f32.mrb[0].mxu0
        %v708 = vadd.f32 %v486, %v707
        %709 = vmatprep.mubr.f32.mxu0 %v402
        %710 = vmatmul.mubr.f32.gmra.mrb[0].mxu0 %v401
        %v711 = vpop.f32.mrb[0].mxu0
        %v712 = vadd.f32 %v482, %v711
        %v713 = vpop.f32.mrb[0].mxu0
        %v714 = vadd.f32 %v486, %v713
        %715 = vmatprep.mubr.f32.mxu0 %v404
        %716 = vmatmul.mubr.f32.gmra.mrb[0].mxu0 %v403
        %v717 = vpop.f32.mrb[0].mxu0
        %v718 = vadd.f32 %v482, %v717
        %v719 = vpop.f32.mrb[0].mxu0
        %v720 = vadd.f32 %v486, %v719
        %721 = vmatprep.mubr.f32.mxu0 %v406
        %722 = vmatmul.mubr.f32.gmra.mrb[0].mxu0 %v405
        %v723 = vpop.f32.mrb[0].mxu0
        %v724 = vadd.f32 %v482, %v723
        %v725 = vpop.f32.mrb[0].mxu0
        %v726 = vadd.f32 %v486, %v725
        %727 = vmatprep.mubr.f32.mxu0 %v408
        %728 = vmatmul.mubr.f32.gmra.mrb[0].mxu0 %v407
        %v729 = vpop.f32.mrb[0].mxu0
        %v730 = vadd.f32 %v482, %v729
        %v731 = vpop.f32.mrb[0].mxu0
        %v732 = vadd.f32 %v486, %v731
        %733 = vmatprep.mubr.f32.mxu0 %v410
        %734 = vmatmul.mubr.f32.gmra.mrb[0].mxu0 %v409
        %v735 = vpop.f32.mrb[0].mxu0
        %v736 = vadd.f32 %v482, %v735
        %v737 = vpop.f32.mrb[0].mxu0
        %v738 = vadd.f32 %v486, %v737
        %739 = vmatprep.mubr.f32.mxu0 %v412
        %740 = vmatmul.mubr.f32.gmra.mrb[0].mxu0 %v411
        %v741 = vpop.f32.mrb[0].mxu0
        %v742 = vadd.f32 %v482, %v741
        %v743 = vpop.f32.mrb[0].mxu0
        %v744 = vadd.f32 %v486, %v743
        %745 = vdwg.mxu0
        %v746 = vld [vmem:[#allocation7] sm:$0xff]
        %v747 = vld [vmem:[#allocation7 + $0x8] sm:$0xff]
        %v748 = vld [vmem:[#allocation7 + $0x10] sm:$0xff]
        %v749 = vld [vmem:[#allocation7 + $0x18] sm:$0xff]
        %v750 = vld [vmem:[#allocation7 + $0x20] sm:$0xff]
        %v751 = vld [vmem:[#allocation7 + $0x28] sm:$0xff]
        %v752 = vld [vmem:[#allocation7 + $0x30] sm:$0xff]
        %v753 = vld [vmem:[#allocation7 + $0x38] sm:$0xff]
        %v754 = vld [vmem:[#allocation7 + $0x40] sm:$0xff]
        %v755 = vld [vmem:[#allocation7 + $0x48] sm:$0xff]
        %v756 = vld [vmem:[#allocation7 + $0x50] sm:$0xff]
        %v757 = vld [vmem:[#allocation7 + $0x58] sm:$0xff]
        %v758 = vld [vmem:[#allocation7 + $0x60] sm:$0xff]
        %v759 = vld [vmem:[#allocation7 + $0x68] sm:$0xff]
        %v760 = vld [vmem:[#allocation7 + $0x70] sm:$0xff]
        %v761 = vld [vmem:[#allocation7 + $0x78] sm:$0xff]
        %v762 = vld [vmem:[#allocation7 + $0x80] sm:$0xff]
        %v763 = vld [vmem:[#allocation7 + $0x88] sm:$0xff]
        %v764 = vld [vmem:[#allocation7 + $0x90] sm:$0xff]
        %v765 = vld [vmem:[#allocation7 + $0x98] sm:$0xff]
        %v766 = vld [vmem:[#allocation7 + $0xa0] sm:$0xff]
        %v767 = vld [vmem:[#allocation7 + $0xa8] sm:$0xff]
        %v768 = vld [vmem:[#allocation7 + $0xb0] sm:$0xff]
        %v769 = vld [vmem:[#allocation7 + $0xb8] sm:$0xff]
        %v770 = vld [vmem:[#allocation7 + $0xc0] sm:$0xff]
        %v771 = vld [vmem:[#allocation7 + $0xc8] sm:$0xff]
        %v772 = vld [vmem:[#allocation7 + $0xd0] sm:$0xff]
        %v773 = vld [vmem:[#allocation7 + $0xd8] sm:$0xff]
        %v774 = vld [vmem:[#allocation7 + $0xe0] sm:$0xff]
        %v775 = vld [vmem:[#allocation7 + $0xe8] sm:$0xff]
        %v776 = vld [vmem:[#allocation7 + $0xf0] sm:$0xff]
        %v777 = vld [vmem:[#allocation7 + $0xf8] sm:$0xff]
        %v778 = vld [vmem:[%s4] sm:$0x3]
        %v780 = vlaneseq
        %v781 = vshrl.u32 %v780, 7
        %v782 = vsub.s32 0, %v781
        %v783 = vrot.slane %v778, %v782
        %v784 = vlaneseq
        %v785 = vshrl.u32 %v784, 7
        %v786 = vsub.s32 1, %v785
        %v787 = vrot.slane %v778, %v786
        %790 = vmatprep.subr.mxu0 %v747
        %791 = vmatpush1.msra.mxu0 %v746
        %792 = vmatprep.subr.mxu0 %v749
        %793 = vmatpush1.msra.mxu0 %v748
        %794 = vmatprep.subr.mxu0 %v751
        %795 = vmatpush1.msra.mxu0 %v750
        %796 = vmatprep.subr.mxu0 %v753
        %797 = vmatpush1.msra.mxu0 %v752
        %798 = vmatprep.subr.mxu0 %v755
        %799 = vmatpush1.msra.mxu0 %v754
        %800 = vmatprep.subr.mxu0 %v757
        %801 = vmatpush1.msra.mxu0 %v756
        %802 = vmatprep.subr.mxu0 %v759
        %803 = vmatpush1.msra.mxu0 %v758
        %804 = vmatprep.subr.mxu0 %v761
        %805 = vmatpush1.msra.mxu0 %v760
        %806 = vmatprep.subr.mxu0 %v763
        %807 = vmatpush1.msra.mxu0 %v762
        %808 = vmatprep.subr.mxu0 %v765
        %809 = vmatpush1.msra.mxu0 %v764
        %810 = vmatprep.subr.mxu0 %v767
        %811 = vmatpush1.msra.mxu0 %v766
        %812 = vmatprep.subr.mxu0 %v769
        %813 = vmatpush1.msra.mxu0 %v768
        %814 = vmatprep.subr.mxu0 %v771
        %815 = vmatpush1.msra.mxu0 %v770
        %816 = vmatprep.subr.mxu0 %v773
        %817 = vmatpush1.msra.mxu0 %v772
        %818 = vmatprep.subr.mxu0 %v775
        %819 = vmatpush1.msra.mxu0 %v774
        %820 = vmatprep.subr.mxu0 %v777
        %821 = vmatpush1.msra.mxu0 %v776
        %822 = vmatprep.subr.mxu0 0.0
        %823 = vmatpush1.msra.mxu0 0.0
        %824 = vmatprep.subr.mxu0 0.0
        %825 = vmatpush1.msra.mxu0 0.0
        %826 = vmatprep.subr.mxu0 0.0
        %827 = vmatpush1.msra.mxu0 0.0
        %828 = vmatprep.subr.mxu0 0.0
        %829 = vmatpush1.msra.mxu0 0.0
        %830 = vmatprep.subr.mxu0 0.0
        %831 = vmatpush1.msra.mxu0 0.0
        %832 = vmatprep.subr.mxu0 0.0
        %833 = vmatpush1.msra.mxu0 0.0
        %834 = vmatprep.subr.mxu0 0.0
        %835 = vmatpush1.msra.mxu0 0.0
        %836 = vmatprep.subr.mxu0 0.0
        %837 = vmatpush1.msra.mxu0 0.0
        %838 = vmatprep.subr.mxu0 0.0
        %839 = vmatpush1.msra.mxu0 0.0
        %840 = vmatprep.subr.mxu0 0.0
        %841 = vmatpush1.msra.mxu0 0.0
        %842 = vmatprep.subr.mxu0 0.0
        %843 = vmatpush1.msra.mxu0 0.0
        %844 = vmatprep.subr.mxu0 0.0
        %845 = vmatpush1.msra.mxu0 0.0
        %846 = vmatprep.subr.mxu0 0.0
        %847 = vmatpush1.msra.mxu0 0.0
        %848 = vmatprep.subr.mxu0 0.0
        %849 = vmatpush1.msra.mxu0 0.0
        %850 = vmatprep.subr.mxu0 0.0
        %851 = vmatpush1.msra.mxu0 0.0
        %852 = vmatprep.subr.mxu0 0.0
        %853 = vmatpush1.msra.mxu0 0.0
        %854 = vmatprep.mubr.f32.mxu0 0.0
        %855 = vmatmul.mubr.f32.gmra.mrb[0].mxu0 %v556
        %v856 = vpop.f32.mrb[0].mxu0
        %v857 = vadd.f32 %v783, %v856
        %v858 = vpop.f32.mrb[0].mxu0
        %v859 = vadd.f32 %v787, %v858
        %860 = vmatprep.mubr.f32.mxu0 0.0
        %861 = vmatmul.mubr.f32.gmra.mrb[0].mxu0 %v562
        %v862 = vpop.f32.mrb[0].mxu0
        %v863 = vadd.f32 %v783, %v862
        %v864 = vpop.f32.mrb[0].mxu0
        %v865 = vadd.f32 %v787, %v864
        %866 = vmatprep.mubr.f32.mxu0 0.0
        %867 = vmatmul.mubr.f32.gmra.mrb[0].mxu0 %v568
        %v868 = vpop.f32.mrb[0].mxu0
        %v869 = vadd.f32 %v783, %v868
        %v870 = vpop.f32.mrb[0].mxu0
        %v871 = vadd.f32 %v787, %v870
        %872 = vmatprep.mubr.f32.mxu0 0.0
        %873 = vmatmul.mubr.f32.gmra.mrb[0].mxu0 %v574
        %v874 = vpop.f32.mrb[0].mxu0
        %v875 = vadd.f32 %v783, %v874
        %v876 = vpop.f32.mrb[0].mxu0
        %v877 = vadd.f32 %v787, %v876
        %878 = vmatprep.mubr.f32.mxu0 0.0
        %879 = vmatmul.mubr.f32.gmra.mrb[0].mxu0 %v580
        %v880 = vpop.f32.mrb[0].mxu0
        %v881 = vadd.f32 %v783, %v880
        %v882 = vpop.f32.mrb[0].mxu0
        %v883 = vadd.f32 %v787, %v882
        %884 = vmatprep.mubr.f32.mxu0 0.0
        %885 = vmatmul.mubr.f32.gmra.mrb[0].mxu0 %v586
        %v886 = vpop.f32.mrb[0].mxu0
        %v887 = vadd.f32 %v783, %v886
        %v888 = vpop.f32.mrb[0].mxu0
        %v889 = vadd.f32 %v787, %v888
        %890 = vmatprep.mubr.f32.mxu0 0.0
        %891 = vmatmul.mubr.f32.gmra.mrb[0].mxu0 %v592
        %v892 = vpop.f32.mrb[0].mxu0
        %v893 = vadd.f32 %v783, %v892
        %v894 = vpop.f32.mrb[0].mxu0
        %v895 = vadd.f32 %v787, %v894
        %896 = vmatprep.mubr.f32.mxu0 0.0
        %897 = vmatmul.mubr.f32.gmra.mrb[0].mxu0 %v598
        %v898 = vpop.f32.mrb[0].mxu0
        %v899 = vadd.f32 %v783, %v898
        %v900 = vpop.f32.mrb[0].mxu0
        %v901 = vadd.f32 %v787, %v900
        %902 = vmatprep.mubr.f32.mxu0 0.0
        %903 = vmatmul.mubr.f32.gmra.mrb[0].mxu0 %v604
        %v904 = vpop.f32.mrb[0].mxu0
        %v905 = vadd.f32 %v783, %v904
        %v906 = vpop.f32.mrb[0].mxu0
        %v907 = vadd.f32 %v787, %v906
        %908 = vmatprep.mubr.f32.mxu0 0.0
        %909 = vmatmul.mubr.f32.gmra.mrb[0].mxu0 %v610
        %v910 = vpop.f32.mrb[0].mxu0
        %v911 = vadd.f32 %v783, %v910
        %v912 = vpop.f32.mrb[0].mxu0
        %v913 = vadd.f32 %v787, %v912
        %914 = vmatprep.mubr.f32.mxu0 0.0
        %915 = vmatmul.mubr.f32.gmra.mrb[0].mxu0 %v616
        %v916 = vpop.f32.mrb[0].mxu0
        %v917 = vadd.f32 %v783, %v916
        %v918 = vpop.f32.mrb[0].mxu0
        %v919 = vadd.f32 %v787, %v918
        %920 = vmatprep.mubr.f32.mxu0 0.0
        %921 = vmatmul.mubr.f32.gmra.mrb[0].mxu0 %v622
        %v922 = vpop.f32.mrb[0].mxu0
        %v923 = vadd.f32 %v783, %v922
        %v924 = vpop.f32.mrb[0].mxu0
        %v925 = vadd.f32 %v787, %v924
        %926 = vmatprep.mubr.f32.mxu0 0.0
        %927 = vmatmul.mubr.f32.gmra.mrb[0].mxu0 %v628
        %v928 = vpop.f32.mrb[0].mxu0
        %v929 = vadd.f32 %v783, %v928
        %v930 = vpop.f32.mrb[0].mxu0
        %v931 = vadd.f32 %v787, %v930
        %932 = vmatprep.mubr.f32.mxu0 0.0
        %933 = vmatmul.mubr.f32.gmra.mrb[0].mxu0 %v634
        %v934 = vpop.f32.mrb[0].mxu0
        %v935 = vadd.f32 %v783, %v934
        %v936 = vpop.f32.mrb[0].mxu0
        %v937 = vadd.f32 %v787, %v936
        %938 = vmatprep.mubr.f32.mxu0 0.0
        %939 = vmatmul.mubr.f32.gmra.mrb[0].mxu0 %v640
        %v940 = vpop.f32.mrb[0].mxu0
        %v941 = vadd.f32 %v783, %v940
        %v942 = vpop.f32.mrb[0].mxu0
        %v943 = vadd.f32 %v787, %v942
        %944 = vmatprep.mubr.f32.mxu0 0.0
        %945 = vmatmul.mubr.f32.gmra.mrb[0].mxu0 %v646
        %v946 = vpop.f32.mrb[0].mxu0
        %v947 = vadd.f32 %v783, %v946
        %v948 = vpop.f32.mrb[0].mxu0
        %v949 = vadd.f32 %v787, %v948
        %950 = vmatprep.mubr.f32.mxu0 0.0
        %951 = vmatmul.mubr.f32.gmra.mrb[0].mxu0 %v652
        %v952 = vpop.f32.mrb[0].mxu0
        %v953 = vadd.f32 %v783, %v952
        %v954 = vpop.f32.mrb[0].mxu0
        %v955 = vadd.f32 %v787, %v954
        %956 = vmatprep.mubr.f32.mxu0 0.0
        %957 = vmatmul.mubr.f32.gmra.mrb[0].mxu0 %v658
        %v958 = vpop.f32.mrb[0].mxu0
        %v959 = vadd.f32 %v783, %v958
        %v960 = vpop.f32.mrb[0].mxu0
        %v961 = vadd.f32 %v787, %v960
        %962 = vmatprep.mubr.f32.mxu0 0.0
        %963 = vmatmul.mubr.f32.gmra.mrb[0].mxu0 %v664
        %v964 = vpop.f32.mrb[0].mxu0
        %v965 = vadd.f32 %v783, %v964
        %v966 = vpop.f32.mrb[0].mxu0
        %v967 = vadd.f32 %v787, %v966
        %968 = vmatprep.mubr.f32.mxu0 0.0
        %969 = vmatmul.mubr.f32.gmra.mrb[0].mxu0 %v670
        %v970 = vpop.f32.mrb[0].mxu0
        %v971 = vadd.f32 %v783, %v970
        %v972 = vpop.f32.mrb[0].mxu0
        %v973 = vadd.f32 %v787, %v972
        %974 = vmatprep.mubr.f32.mxu0 0.0
        %975 = vmatmul.mubr.f32.gmra.mrb[0].mxu0 %v676
        %v976 = vpop.f32.mrb[0].mxu0
        %v977 = vadd.f32 %v783, %v976
        %v978 = vpop.f32.mrb[0].mxu0
        %v979 = vadd.f32 %v787, %v978
        %980 = vmatprep.mubr.f32.mxu0 0.0
        %981 = vmatmul.mubr.f32.gmra.mrb[0].mxu0 %v682
        %v982 = vpop.f32.mrb[0].mxu0
        %v983 = vadd.f32 %v783, %v982
        %v984 = vpop.f32.mrb[0].mxu0
        %v985 = vadd.f32 %v787, %v984
        %986 = vmatprep.mubr.f32.mxu0 0.0
        %987 = vmatmul.mubr.f32.gmra.mrb[0].mxu0 %v688
        %v988 = vpop.f32.mrb[0].mxu0
        %v989 = vadd.f32 %v783, %v988
        %v990 = vpop.f32.mrb[0].mxu0
        %v991 = vadd.f32 %v787, %v990
        %992 = vmatprep.mubr.f32.mxu0 0.0
        %993 = vmatmul.mubr.f32.gmra.mrb[0].mxu0 %v694
        %v994 = vpop.f32.mrb[0].mxu0
        %v995 = vadd.f32 %v783, %v994
        %v996 = vpop.f32.mrb[0].mxu0
        %v997 = vadd.f32 %v787, %v996
        %998 = vmatprep.mubr.f32.mxu0 0.0
        %999 = vmatmul.mubr.f32.gmra.mrb[0].mxu0 %v700
        %v1000 = vpop.f32.mrb[0].mxu0
        %v1001 = vadd.f32 %v783, %v1000
        %v1002 = vpop.f32.mrb[0].mxu0
        %v1003 = vadd.f32 %v787, %v1002
        %1004 = vmatprep.mubr.f32.mxu0 0.0
        %1005 = vmatmul.mubr.f32.gmra.mrb[0].mxu0 %v706
        %v1006 = vpop.f32.mrb[0].mxu0
        %v1007 = vadd.f32 %v783, %v1006
        %v1008 = vpop.f32.mrb[0].mxu0
        %v1009 = vadd.f32 %v787, %v1008
        %1010 = vmatprep.mubr.f32.mxu0 0.0
        %1011 = vmatmul.mubr.f32.gmra.mrb[0].mxu0 %v712
        %v1012 = vpop.f32.mrb[0].mxu0
        %v1013 = vadd.f32 %v783, %v1012
        %v1014 = vpop.f32.mrb[0].mxu0
        %v1015 = vadd.f32 %v787, %v1014
        %1016 = vmatprep.mubr.f32.mxu0 0.0
        %1017 = vmatmul.mubr.f32.gmra.mrb[0].mxu0 %v718
        %v1018 = vpop.f32.mrb[0].mxu0
        %v1019 = vadd.f32 %v783, %v1018
        %v1020 = vpop.f32.mrb[0].mxu0
        %v1021 = vadd.f32 %v787, %v1020
        %1022 = vmatprep.mubr.f32.mxu0 0.0
        %1023 = vmatmul.mubr.f32.gmra.mrb[0].mxu0 %v724
        %v1024 = vpop.f32.mrb[0].mxu0
        %v1025 = vadd.f32 %v783, %v1024
        %v1026 = vpop.f32.mrb[0].mxu0
        %v1027 = vadd.f32 %v787, %v1026
        %1028 = vmatprep.mubr.f32.mxu0 0.0
        %1029 = vmatmul.mubr.f32.gmra.mrb[0].mxu0 %v730
        %v1030 = vpop.f32.mrb[0].mxu0
        %v1031 = vadd.f32 %v783, %v1030
        %v1032 = vpop.f32.mrb[0].mxu0
        %v1033 = vadd.f32 %v787, %v1032
        %1034 = vmatprep.mubr.f32.mxu0 0.0
        %1035 = vmatmul.mubr.f32.gmra.mrb[0].mxu0 %v736
        %v1036 = vpop.f32.mrb[0].mxu0
        %v1037 = vadd.f32 %v783, %v1036
        %v1038 = vpop.f32.mrb[0].mxu0
        %v1039 = vadd.f32 %v787, %v1038
        %1040 = vmatprep.mubr.f32.mxu0 0.0
        %1041 = vmatmul.mubr.f32.gmra.mrb[0].mxu0 %v742
        %v1042 = vpop.f32.mrb[0].mxu0
        %v1043 = vadd.f32 %v783, %v1042
        %v1044 = vpop.f32.mrb[0].mxu0
        %v1045 = vadd.f32 %v787, %v1044
        %1046 = vdwg.mxu0
        %1047 = vst [vmem:[%s337] sm:$0xff] %v556
        %1048 = vst [vmem:[%s337 + $0x8] sm:$0xff] %v562
        %1049 = vst [vmem:[%s337 + $0x10] sm:$0xff] %v568
        %1050 = vst [vmem:[%s337 + $0x18] sm:$0xff] %v574
        %1051 = vst [vmem:[%s337 + $0x20] sm:$0xff] %v580
        %1052 = vst [vmem:[%s337 + $0x28] sm:$0xff] %v586
        %1053 = vst [vmem:[%s337 + $0x30] sm:$0xff] %v592
        %1054 = vst [vmem:[%s337 + $0x38] sm:$0xff] %v598
        %1055 = vst [vmem:[%s337 + $0x40] sm:$0xff] %v604
        %1056 = vst [vmem:[%s337 + $0x48] sm:$0xff] %v610
        %1057 = vst [vmem:[%s337 + $0x50] sm:$0xff] %v616
        %1058 = vst [vmem:[%s337 + $0x58] sm:$0xff] %v622
        %1059 = vst [vmem:[%s337 + $0x60] sm:$0xff] %v628
        %1060 = vst [vmem:[%s337 + $0x68] sm:$0xff] %v634
        %1061 = vst [vmem:[%s337 + $0x70] sm:$0xff] %v640
        %1062 = vst [vmem:[%s337 + $0x78] sm:$0xff] %v646
        %1063 = vst [vmem:[%s337 + $0x80] sm:$0xff] %v652
        %1064 = vst [vmem:[%s337 + $0x88] sm:$0xff] %v658
        %1065 = vst [vmem:[%s337 + $0x90] sm:$0xff] %v664
        %1066 = vst [vmem:[%s337 + $0x98] sm:$0xff] %v670
        %1067 = vst [vmem:[%s337 + $0xa0] sm:$0xff] %v676
        %1068 = vst [vmem:[%s337 + $0xa8] sm:$0xff] %v682
        %1069 = vst [vmem:[%s337 + $0xb0] sm:$0xff] %v688
        %1070 = vst [vmem:[%s337 + $0xb8] sm:$0xff] %v694
        %1071 = vst [vmem:[%s337 + $0xc0] sm:$0xff] %v700
        %1072 = vst [vmem:[%s337 + $0xc8] sm:$0xff] %v706
        %1073 = vst [vmem:[%s337 + $0xd0] sm:$0xff] %v712
        %1074 = vst [vmem:[%s337 + $0xd8] sm:$0xff] %v718
        %1075 = vst [vmem:[%s337 + $0xe0] sm:$0xff] %v724
        %1076 = vst [vmem:[%s337 + $0xe8] sm:$0xff] %v730
        %1077 = vst [vmem:[%s337 + $0xf0] sm:$0xff] %v736
        %1078 = vst [vmem:[%s337 + $0xf8] sm:$0xff] %v742
        %1079 = vst [vmem:[%s344] sm:$0xff] %v558
        %1080 = vst [vmem:[%s344 + $0x8] sm:$0xff] %v564
        %1081 = vst [vmem:[%s344 + $0x10] sm:$0xff] %v570
        %1082 = vst [vmem:[%s344 + $0x18] sm:$0xff] %v576
        %1083 = vst [vmem:[%s344 + $0x20] sm:$0xff] %v582
        %1084 = vst [vmem:[%s344 + $0x28] sm:$0xff] %v588
        %1085 = vst [vmem:[%s344 + $0x30] sm:$0xff] %v594
        %1086 = vst [vmem:[%s344 + $0x38] sm:$0xff] %v600
        %1087 = vst [vmem:[%s344 + $0x40] sm:$0xff] %v606
        %1088 = vst [vmem:[%s344 + $0x48] sm:$0xff] %v612
        %1089 = vst [vmem:[%s344 + $0x50] sm:$0xff] %v618
        %1090 = vst [vmem:[%s344 + $0x58] sm:$0xff] %v624
        %1091 = vst [vmem:[%s344 + $0x60] sm:$0xff] %v630
        %1092 = vst [vmem:[%s344 + $0x68] sm:$0xff] %v636
        %1093 = vst [vmem:[%s344 + $0x70] sm:$0xff] %v642
        %1094 = vst [vmem:[%s344 + $0x78] sm:$0xff] %v648
        %1095 = vst [vmem:[%s344 + $0x80] sm:$0xff] %v654
        %1096 = vst [vmem:[%s344 + $0x88] sm:$0xff] %v660
        %1097 = vst [vmem:[%s344 + $0x90] sm:$0xff] %v666
        %1098 = vst [vmem:[%s344 + $0x98] sm:$0xff] %v672
        %1099 = vst [vmem:[%s344 + $0xa0] sm:$0xff] %v678
        %1100 = vst [vmem:[%s344 + $0xa8] sm:$0xff] %v684
        %1101 = vst [vmem:[%s344 + $0xb0] sm:$0xff] %v690
        %1102 = vst [vmem:[%s344 + $0xb8] sm:$0xff] %v696
        %1103 = vst [vmem:[%s344 + $0xc0] sm:$0xff] %v702
        %1104 = vst [vmem:[%s344 + $0xc8] sm:$0xff] %v708
        %1105 = vst [vmem:[%s344 + $0xd0] sm:$0xff] %v714
        %1106 = vst [vmem:[%s344 + $0xd8] sm:$0xff] %v720
        %1107 = vst [vmem:[%s344 + $0xe0] sm:$0xff] %v726
        %1108 = vst [vmem:[%s344 + $0xe8] sm:$0xff] %v732
        %1109 = vst [vmem:[%s344 + $0xf0] sm:$0xff] %v738
        %1110 = vst [vmem:[%s344 + $0xf8] sm:$0xff] %v744
        %1111 = vst [vmem:[%s330] sm:$0xff] %v857
        %1112 = vst [vmem:[%s330 + $0x8] sm:$0xff] %v859
        %1113 = vst [vmem:[%s330 + $0x10] sm:$0xff] %v863
        %1114 = vst [vmem:[%s330 + $0x18] sm:$0xff] %v865
        %1115 = vst [vmem:[%s330 + $0x20] sm:$0xff] %v869
        %1116 = vst [vmem:[%s330 + $0x28] sm:$0xff] %v871
        %1117 = vst [vmem:[%s330 + $0x30] sm:$0xff] %v875
        %1118 = vst [vmem:[%s330 + $0x38] sm:$0xff] %v877
        %1119 = vst [vmem:[%s330 + $0x40] sm:$0xff] %v881
        %1120 = vst [vmem:[%s330 + $0x48] sm:$0xff] %v883
        %1121 = vst [vmem:[%s330 + $0x50] sm:$0xff] %v887
        %1122 = vst [vmem:[%s330 + $0x58] sm:$0xff] %v889
        %1123 = vst [vmem:[%s330 + $0x60] sm:$0xff] %v893
        %1124 = vst [vmem:[%s330 + $0x68] sm:$0xff] %v895
        %1125 = vst [vmem:[%s330 + $0x70] sm:$0xff] %v899
        %1126 = vst [vmem:[%s330 + $0x78] sm:$0xff] %v901
        %1127 = vst [vmem:[%s330 + $0x80] sm:$0xff] %v905
        %1128 = vst [vmem:[%s330 + $0x88] sm:$0xff] %v907
        %1129 = vst [vmem:[%s330 + $0x90] sm:$0xff] %v911
        %1130 = vst [vmem:[%s330 + $0x98] sm:$0xff] %v913
        %1131 = vst [vmem:[%s330 + $0xa0] sm:$0xff] %v917
        %1132 = vst [vmem:[%s330 + $0xa8] sm:$0xff] %v919
        %1133 = vst [vmem:[%s330 + $0xb0] sm:$0xff] %v923
        %1134 = vst [vmem:[%s330 + $0xb8] sm:$0xff] %v925
        %1135 = vst [vmem:[%s330 + $0xc0] sm:$0xff] %v929
        %1136 = vst [vmem:[%s330 + $0xc8] sm:$0xff] %v931
        %1137 = vst [vmem:[%s330 + $0xd0] sm:$0xff] %v935
        %1138 = vst [vmem:[%s330 + $0xd8] sm:$0xff] %v937
        %1139 = vst [vmem:[%s330 + $0xe0] sm:$0xff] %v941
        %1140 = vst [vmem:[%s330 + $0xe8] sm:$0xff] %v943
        %1141 = vst [vmem:[%s330 + $0xf0] sm:$0xff] %v947
        %1142 = vst [vmem:[%s330 + $0xf8] sm:$0xff] %v949
        %1143 = vst [vmem:[%s330 + $0x100] sm:$0xff] %v953
        %1144 = vst [vmem:[%s330 + $0x108] sm:$0xff] %v955
        %1145 = vst [vmem:[%s330 + $0x110] sm:$0xff] %v959
        %1146 = vst [vmem:[%s330 + $0x118] sm:$0xff] %v961
        %1147 = vst [vmem:[%s330 + $0x120] sm:$0xff] %v965
        %1148 = vst [vmem:[%s330 + $0x128] sm:$0xff] %v967
        %1149 = vst [vmem:[%s330 + $0x130] sm:$0xff] %v971
        %1150 = vst [vmem:[%s330 + $0x138] sm:$0xff] %v973
        %1151 = vst [vmem:[%s330 + $0x140] sm:$0xff] %v977
        %1152 = vst [vmem:[%s330 + $0x148] sm:$0xff] %v979
        %1153 = vst [vmem:[%s330 + $0x150] sm:$0xff] %v983
        %1154 = vst [vmem:[%s330 + $0x158] sm:$0xff] %v985
        %1155 = vst [vmem:[%s330 + $0x160] sm:$0xff] %v989
        %1156 = vst [vmem:[%s330 + $0x168] sm:$0xff] %v991
        %1157 = vst [vmem:[%s330 + $0x170] sm:$0xff] %v995
        %1158 = vst [vmem:[%s330 + $0x178] sm:$0xff] %v997
        %1159 = vst [vmem:[%s330 + $0x180] sm:$0xff] %v1001
        %1160 = vst [vmem:[%s330 + $0x188] sm:$0xff] %v1003
        %1161 = vst [vmem:[%s330 + $0x190] sm:$0xff] %v1007
        %1162 = vst [vmem:[%s330 + $0x198] sm:$0xff] %v1009
        %1163 = vst [vmem:[%s330 + $0x1a0] sm:$0xff] %v1013
        %1164 = vst [vmem:[%s330 + $0x1a8] sm:$0xff] %v1015
        %1165 = vst [vmem:[%s330 + $0x1b0] sm:$0xff] %v1019
        %1166 = vst [vmem:[%s330 + $0x1b8] sm:$0xff] %v1021
        %1167 = vst [vmem:[%s330 + $0x1c0] sm:$0xff] %v1025
        %1168 = vst [vmem:[%s330 + $0x1c8] sm:$0xff] %v1027
        %1169 = vst [vmem:[%s330 + $0x1d0] sm:$0xff] %v1031
        %1170 = vst [vmem:[%s330 + $0x1d8] sm:$0xff] %v1033
        %1171 = vst [vmem:[%s330 + $0x1e0] sm:$0xff] %v1037
        %1172 = vst [vmem:[%s330 + $0x1e8] sm:$0xff] %v1039
        %1173 = vst [vmem:[%s330 + $0x1f0] sm:$0xff] %v1043
        %1174 = vst [vmem:[%s330 + $0x1f8] sm:$0xff] %v1045
        %s1175 = sand.u32 %s147, 1
        %s1176 = scalar_lea.sflag [#allocation4], %s1175
        %s1177 = sand.u32 %s147, 1
        %s1178 = smul.addr %s1177, 512
        %s1179 = scalar_lea.vmem [#allocation8], %s1178
        %s1180 = sand.u32 %s29, 1
        %s1181 = scalar_lea.sflag [#allocation10], %s1180
        %s1182 = sand.u32 %s173, 1
        %s1183 = smul.addr %s1182, 256
        %s1184 = scalar_lea.vmem [#allocation9], %s1183
        %s1185 = sand.u32 %s29, 1
        %s1186 = scalar_lea.sflag [#allocation10], %s1185
        %s1187 = sand.u32 %s199, 1
        %s1188 = smul.addr %s1187, 256
        %s1189 = scalar_lea.vmem [#allocation11], %s1188
        // Predicated region
        $region53: #{tpu_custom_call.1} parent=39 // pred_check
          %p1190 = pneg %p157
        $region54: #{tpu_custom_call.1} parent=39 // pred_check_branch
          %1192 = sbr.rel (%p1190) target = $region56
        $region55: #{tpu_custom_call.1} parent=39 // pred_region
          %s1193 = smul.u32 32, %s29
          %s1195 = ssub.s32 8192, 8192
          %1196 = vsyncadd %s1176, %s1195
          %s1197 = smul.addr %s1193, 2
          %s1198 = smul.addr %s1197, 128
          %s1199 = scalar_lea.hbm %s5, %s1198
          %s1200 = sshll.u32 %s1179, 4
          %s1201 = int_to_ptr.vmem [resolvable:$true] %s1200
          %1206 = dma.vmem_to_hbm [thread:$0]  %s1201, 8192, %s1199, %s1176, 256, 256, 16
        $region56: #{tpu_custom_call.1} parent=39 // pred_fallthru
          _
        // Predicated region
        $region57: #{tpu_custom_call.1} parent=39 // pred_check
          %p1207 = pneg %p183
        $region58: #{tpu_custom_call.1} parent=39 // pred_check_branch
          %1209 = sbr.rel (%p1207) target = $region60
        $region59: #{tpu_custom_call.1} parent=39 // pred_region
          %s1210 = smul.u32 32, %s29
          %s1212 = ssub.s32 4096, 4096
          %1213 = vsyncadd %s1181, %s1212
          %s1214 = smul.addr %s1210, 128
          %s1215 = scalar_lea.hbm %s6, %s1214
          %s1216 = sshll.u32 %s1184, 4
          %s1217 = int_to_ptr.vmem [resolvable:$true] %s1216
          %1222 = dma.vmem_to_hbm [thread:$0]  %s1217, 4096, %s1215, %s1181, 128, 128, 8
        $region60: #{tpu_custom_call.1} parent=39 // pred_fallthru
          _
        // Predicated region
        $region61: #{tpu_custom_call.1} parent=39 // pred_check
          %p1223 = pneg %p209
        $region62: #{tpu_custom_call.1} parent=39 // pred_check_branch
          %1225 = sbr.rel (%p1223) target = $region64
        $region63: #{tpu_custom_call.1} parent=39 // pred_region
          %s1226 = smul.u32 32, %s29
          %s1228 = ssub.s32 4096, 4096
          %1229 = vsyncadd %s1186, %s1228
          %s1230 = smul.addr %s1226, 128
          %s1231 = scalar_lea.hbm %s7, %s1230
          %s1232 = sshll.u32 %s1189, 4
          %s1233 = int_to_ptr.vmem [resolvable:$true] %s1232
          %1238 = dma.vmem_to_hbm [thread:$0]  %s1233, 4096, %s1231, %s1186, 128, 128, 8
        $region64: #{tpu_custom_call.1} parent=39 // pred_fallthru
          _
      $region40: #{tpu_custom_call.1} parent=5 // pred_fallthru
        _
      %p1239 = scmp.le.s32.totalorder 2, %s24
      // Predicated region
      $region65: #{tpu_custom_call.1} parent=5 // pred_check
        %p1240 = pneg %p1239
      $region66: #{tpu_custom_call.1} parent=5 // pred_check_branch
        %1242 = sbr.rel (%p1240) target = $region68
      $region67: #{tpu_custom_call.1} parent=5 // pred_region
        %s1243 = ssub.s32 %s24, 2
        // Predicated region
        $region69: #{tpu_custom_call.1} parent=67 // pred_check
          %p1244 = pneg %p163
        $region70: #{tpu_custom_call.1} parent=67 // pred_check_branch
          %1246 = sbr.rel (%p1244) target = $region72
        $region71: #{tpu_custom_call.1} parent=67 // pred_region
          %s1247 = sand.u32 %s148, 1
          %s1248 = scalar_lea.sflag [#allocation4], %s1247
          %s1249 = sand.u32 %s148, 1
          %s1250 = smul.addr %s1249, 512
          %s1251 = scalar_lea.vmem [#allocation8], %s1250
          %1252 = dma.done %s1248, 8192
        $region72: #{tpu_custom_call.1} parent=67 // pred_fallthru
          _
        // Predicated region
        $region73: #{tpu_custom_call.1} parent=67 // pred_check
          %p1253 = pneg %p189
        $region74: #{tpu_custom_call.1} parent=67 // pred_check_branch
          %1255 = sbr.rel (%p1253) target = $region76
        $region75: #{tpu_custom_call.1} parent=67 // pred_region
          %s1256 = sand.u32 %s30, 1
          %s1257 = scalar_lea.sflag [#allocation10], %s1256
          %s1258 = sand.u32 %s174, 1
          %s1259 = smul.addr %s1258, 256
          %s1260 = scalar_lea.vmem [#allocation9], %s1259
          %1261 = dma.done %s1257, 4096
        $region76: #{tpu_custom_call.1} parent=67 // pred_fallthru
          _
        // Predicated region
        $region77: #{tpu_custom_call.1} parent=67 // pred_check
          %p1262 = pneg %p215
        $region78: #{tpu_custom_call.1} parent=67 // pred_check_branch
          %1264 = sbr.rel (%p1262) target = $region80
        $region79: #{tpu_custom_call.1} parent=67 // pred_region
          %s1265 = sand.u32 %s30, 1
          %s1266 = scalar_lea.sflag [#allocation10], %s1265
          %s1267 = sand.u32 %s200, 1
          %s1268 = smul.addr %s1267, 256
          %s1269 = scalar_lea.vmem [#allocation11], %s1268
          %1270 = dma.done %s1266, 4096
        $region80: #{tpu_custom_call.1} parent=67 // pred_fallthru
          _
      $region68: #{tpu_custom_call.1} parent=5 // pred_fallthru
        _
    $region6: #{tpu_custom_call.1} parent=1 // loop_footer
      %s28 = sadd.s32 1, %s24
    $region7: #{tpu_custom_call.1} parent=1 // loop_footer_branch
      %23 = sbr.rel target = $region3
    $region8: #{tpu_custom_call.1} parent=1 // loop_exit
      _
    %1271 = vsyncpa [#allocation3], 1
    %s1272 = scalar_lea.sflag [#allocation3], 1
    %1273 = vsyncpa %s1272, 1
    %1274 = vsyncpa [#allocation6], 1
    %1275 = vsyncpa [#allocation4], 1
    %s1276 = scalar_lea.sflag [#allocation4], 1
    %1277 = vsyncpa %s1276, 1
    %1278 = vsyncpa [#allocation10], 1
    %s1279 = scalar_lea.sflag [#allocation10], 1
    %1280 = vsyncpa %s1279, 1

</llo_original>
